<compile_context>
chip_gen: v7x
topology: tpu7x:2x2x1
jax: 0.10.0
libtpu: 0.0.40
codegen_flags: <defaults>
</compile_context>

<pallas_src>
import functools
import math

import jax
import jax.numpy as jnp
from jax.experimental import pallas as pl
from jax.experimental.pallas import tpu as pltpu

LANE = 128                      # lane width (last dim)
SUBLANE = 8                     # f32 sublane multiple (second-to-last dim)
_BATCH_TILE = 256               # batch tile for the large-batch grid path
_SINGLE_PROGRAM_MAX_BATCH = 512  # below this, a single program is cheapest


def _round_up(x, m):
    return ((x + m - 1) // m) * m


# ----------------------------------------------------------------------------
# Kernels
# ----------------------------------------------------------------------------
def _mlp_chain(h, w_ref, b_ref):
    """Unrolled h = relu(h @ W_li + b_li) for all layers; h stays in vregs."""
    num_layers = w_ref.shape[0]
    for li in range(num_layers):                 # static unroll at trace time
        w = w_ref[li]                            # (F, F) bf16 weight tile
        b = b_ref[li]                            # (1, F) f32 bias row
        y = jnp.dot(h.astype(w.dtype), w, preferred_element_type=jnp.float32)
        h = jnp.maximum(y + b, 0.0)              # f32 epilogue (v5e-friendly)
    return h


def _fused_mlp_kernel_single(x_ref, w_ref, b_ref, o_ref, h0_ref):
    """Single-program path: x arrives at its natural (batch, in) shape and is
    zero-padded into a VMEM scratch tile here (no padded HBM copy)."""
    h0_ref[...] = jnp.zeros_like(h0_ref)
    rows, cols = x_ref.shape
    h0_ref[0:rows, 0:cols] = x_ref[...]
    o_ref[...] = _mlp_chain(h0_ref[...], w_ref, b_ref).astype(o_ref.dtype)


def _fused_mlp_kernel_tiled(x_ref, w_ref, b_ref, o_ref):
    """Grid-over-batch path: activation tile already lane/sublane padded."""
    o_ref[...] = _mlp_chain(x_ref[...], w_ref, b_ref).astype(o_ref.dtype)


# ----------------------------------------------------------------------------
# Parameter construction / packing
# ----------------------------------------------------------------------------
def build_network_params(I, N, key):
    """Per-layer (W^T, b) mirroring Network.__init__ shapes (PyTorch-style
    uniform init bound).  Stored transposed: (in_features, out_features)."""
    num_layers = math.floor(math.log2(N)) + 1
    params = []
    n = N
    for i in range(num_layers):
        if i == 0:
            fin, fout = I, N
        else:
            fin, fout = n, math.floor(n / 2.0)
            n = fout
        key, kw, kb = jax.random.split(key, 3)
        bound = 1.0 / math.sqrt(fin)
        w_t = jax.random.uniform(kw, (fin, fout), jnp.float32, -bound, bound)
        b = jax.random.uniform(kb, (fout,), jnp.float32, -bound, bound)
        params.append((w_t, b))
    return params


def pack_network_params(params):
    """Zero-pad every layer's (W^T, b) to one common lane-aligned (F, F) tile
    and stack: (L, F, F) bf16 weights + (L, 1, F) f32 biases.  Zero padding
    keeps padded feature lanes exactly zero through relu(h @ W + b).

    # TODO(synk): per-layer tiling when layer widths differ wildly (a huge
    # first layer would make padding everything to a square F x F wasteful).
    """
    f_max = max(max(w.shape) for w, _ in params)
    f_pad = _round_up(max(f_max, LANE), LANE)
    num_layers = len(params)
    w_stack = jnp.zeros((num_layers, f_pad, f_pad), jnp.float32)
    b_stack = jnp.zeros((num_layers, 1, f_pad), jnp.float32)
    for li, (w_t, b) in enumerate(params):
        fin, fout = w_t.shape
        w_stack = w_stack.at[li, :fin, :fout].set(w_t)
        b_stack = b_stack.at[li, 0, :fout].set(b)
    # bf16 weights: halves the only non-trivial DMA; MXU-native input dtype.
    return w_stack.astype(jnp.bfloat16), b_stack


# ----------------------------------------------------------------------------
# VMEM budget guard
# ----------------------------------------------------------------------------
def _vmem_capacity_bytes():
    try:
        info = pltpu.get_tpu_info()
        cap = getattr(info, "vmem_capacity_bytes", None)
        if cap:
            return int(cap)
    except Exception:
        pass
    return 64 * 1024 * 1024      # v7x has the smallest VMEM (64 MiB / TC)


def _vmem_limit_and_guard(needed_bytes):
    budget = int(_vmem_capacity_bytes() * 0.8)
    if needed_bytes > budget:
        # TODO(synk): tiled/pipelined fallback (grid over Fin with an f32
        # accumulator, pl.when init/finalize, or pltpu.emit_pipeline) for
        # parameter stacks that do not fit VMEM-resident.
        raise NotImplementedError(
            f"fused MLP stack needs ~{needed_bytes} B VMEM, budget {budget} B")
    return int(min(budget, max(4 * needed_bytes, 16 * 1024 * 1024)))


# ----------------------------------------------------------------------------
# Forward
# ----------------------------------------------------------------------------
@functools.partial(jax.jit, static_argnames=("out_features",))
def network_forward(x, w_stack, b_stack, *, out_features):
    batch, in_features = x.shape
    num_layers, f_pad, _ = w_stack.shape
    param_bytes = (int(w_stack.size) * w_stack.dtype.itemsize
                   + int(b_stack.size) * b_stack.dtype.itemsize)

    if batch <= _SINGLE_PROGRAM_MAX_BATCH:
        # ---- tiny-batch path: one program, params + activations VMEM-resident
        b_pad = _round_up(max(batch, SUBLANE), SUBLANE)
        act_bytes = (2 * b_pad * f_pad + batch * in_features) * 4
        vmem_limit = _vmem_limit_and_guard(2 * (param_bytes + act_bytes))
        cost = pl.CostEstimate(
            flops=int(2 * b_pad * f_pad * f_pad * num_layers),
            transcendentals=0,
            bytes_accessed=int(batch * in_features * 4 + param_bytes
                               + b_pad * f_pad * 4))
        vmem_spec = pl.BlockSpec(memory_space=pltpu.MemorySpace.VMEM)
        out = pl.pallas_call(
            _fused_mlp_kernel_single,
            out_shape=jax.ShapeDtypeStruct((b_pad, f_pad), jnp.float32),
            in_specs=[vmem_spec, vmem_spec, vmem_spec],
            out_specs=vmem_spec,
            scratch_shapes=[pltpu.VMEM((b_pad, f_pad), jnp.float32)],
            compiler_params=pltpu.CompilerParams(vmem_limit_bytes=vmem_limit),
            cost_estimate=cost,
        )(x, w_stack, b_stack)
        return out[:batch, :out_features]

    # ---- large-batch path: grid over batch tiles, weights stay resident,
    #      "parallel" axis lets megacore (v7x) split the tiles across cores.
    tb = _BATCH_TILE
    b_pad = _round_up(batch, tb)
    # Wrapper-side pad is amortized over the (large) batch here.
    x_p = jnp.zeros((b_pad, f_pad), jnp.float32)
    x_p = x_p.at[:batch, :in_features].set(x)
    needed = 2 * (param_bytes + 2 * tb * f_pad * 4)
    vmem_limit = _vmem_limit_and_guard(needed)
    cost = pl.CostEstimate(
        flops=int(2 * b_pad * f_pad * f_pad * num_layers),
        transcendentals=0,
        bytes_accessed=int(2 * b_pad * f_pad * 4 + param_bytes))
    out = pl.pallas_call(
        _fused_mlp_kernel_tiled,
        out_shape=jax.ShapeDtypeStruct((b_pad, f_pad), jnp.float32),
        grid_spec=pltpu.PrefetchScalarGridSpec(
            num_scalar_prefetch=0,
            grid=(b_pad // tb,),
            in_specs=[
                pl.BlockSpec((tb, f_pad), lambda i: (i, 0)),
                pl.BlockSpec((num_layers, f_pad, f_pad), lambda i: (0, 0, 0)),
                pl.BlockSpec((num_layers, 1, f_pad), lambda i: (0, 0, 0)),
            ],
            out_specs=pl.BlockSpec((tb, f_pad), lambda i: (i, 0)),
        ),
        compiler_params=pltpu.CompilerParams(
            dimension_semantics=("parallel",),
            vmem_limit_bytes=vmem_limit),
        cost_estimate=cost,
    )(x_p, w_stack, b_stack)
    return out[:batch, :out_features]


# ----------------------------------------------------------------------------
# Pure-JAX references
# ----------------------------------------------------------------------------
def network_forward_ref_f32(x, params):
    """Full-precision reference (module semantics)."""
    for w_t, b in params:
        x = jnp.maximum(x @ w_t + b, 0.0)
    return x


def network_forward_ref_bf16(x, params):
    """Reference with the kernel's numerics (bf16 inputs, f32 accumulate)."""
    h = x
    for w_t, b in params:
        y = jnp.dot(h.astype(jnp.bfloat16), w_t.astype(jnp.bfloat16),
                    preferred_element_type=jnp.float32)
        h = jnp.maximum(y + b, 0.0)
    return h


if __name__ == "__main__":
    # Shapes consistent with the module: I=32 input features, N=16 first
    # hidden width -> layers Linear(32,16), (16,8), (8,4), (4,2), (2,1).
    I_feat, N_hidden, batch = 32, 16, 4

    key = jax.random.PRNGKey(0)
    key, kx = jax.random.split(key)
    x = jax.random.normal(kx, (batch, I_feat), jnp.float32)

    params = build_network_params(I_feat, N_hidden, key)
    w_stack, b_stack = pack_network_params(params)
    out_features = params[-1][0].shape[1]      # == 1

    # --- small-batch (single-program) path
    out = network_forward(x, w_stack, b_stack, out_features=out_features)
    out = jax.block_until_ready(out)
    ref_bf16 = network_forward_ref_bf16(x, params)
    ref_f32 = network_forward_ref_f32(x, params)
    assert out.shape == (batch, out_features), out.shape
    assert jnp.allclose(out, ref_bf16, atol=1e-3, rtol=1e-3), (out, ref_bf16)
    assert jnp.allclose(out, ref_f32, atol=5e-2, rtol=5e-2), (out, ref_f32)

    # --- large-batch (grid over batch tiles, megacore-parallel) path
    batch_big = 2048
    key, kx2 = jax.random.split(key)
    x_big = jax.random.normal(kx2, (batch_big, I_feat), jnp.float32)
    out_big = jax.block_until_ready(
        network_forward(x_big, w_stack, b_stack, out_features=out_features))
    ref_big = network_forward_ref_bf16(x_big, params)
    assert out_big.shape == (batch_big, out_features), out_big.shape
    assert jnp.allclose(out_big, ref_big, atol=1e-3, rtol=1e-3)

    print("KERNEL_OK")
</pallas_src>

<mosaic_0001>
module attributes {stable_mosaic.version = 11 : i64} {
  func.func @_fused_mlp_kernel_single(%arg0: memref<4x32xf32, #tpu.memory_space<vmem>>, %arg1: memref<5x128x128xbf16, #tpu.memory_space<vmem>>, %arg2: memref<5x1x128xf32, #tpu.memory_space<vmem>>, %arg3: memref<8x128xf32, #tpu.memory_space<vmem>>, %arg4: memref<8x128xf32, #tpu.memory_space<vmem>>) attributes {dimension_semantics = [], scalar_prefetch = 0 : i64, scratch_operands = 1 : i64, tpu.core_type = #tpu.core_type<tc>} {
    %cst = arith.constant 0.000000e+00 : f32
    %0 = vector.broadcast %cst : f32 to vector<8x128xf32>
    %c0 = arith.constant 0 : index
    %c0_0 = arith.constant 0 : index
    %1 = vector.load %arg4[%c0, %c0_0] : memref<8x128xf32, #tpu.memory_space<vmem>>, vector<8x128xf32>
    tpu.vector_store %arg4[%c0, %c0_0], %0 {strides = array<i32>} : memref<8x128xf32, #tpu.memory_space<vmem>>, vector<8x128xf32>,
    %c0_1 = arith.constant 0 : index
    %c0_2 = arith.constant 0 : index
    %2 = vector.load %arg0[%c0_1, %c0_2] : memref<4x32xf32, #tpu.memory_space<vmem>>, vector<4x32xf32>
    %c0_3 = arith.constant 0 : index
    %c0_4 = arith.constant 0 : index
    %3 = vector.load %arg4[%c0_3, %c0_4] : memref<8x128xf32, #tpu.memory_space<vmem>>, vector<4x32xf32>
    tpu.vector_store %arg4[%c0_3, %c0_4], %2 {strides = array<i32>} : memref<8x128xf32, #tpu.memory_space<vmem>>, vector<4x32xf32>,
    %c0_5 = arith.constant 0 : index
    %c0_6 = arith.constant 0 : index
    %4 = vector.load %arg4[%c0_5, %c0_6] : memref<8x128xf32, #tpu.memory_space<vmem>>, vector<8x128xf32>
    %c0_7 = arith.constant 0 : index
    %c0_8 = arith.constant 0 : index
    %c0_9 = arith.constant 0 : index
    %5 = vector.load %arg1[%c0_7, %c0_8, %c0_9] : memref<5x128x128xbf16, #tpu.memory_space<vmem>>, vector<1x128x128xbf16>
    %6 = vector.shape_cast %5 : vector<1x128x128xbf16> to vector<128x128xbf16>
    %c0_10 = arith.constant 0 : index
    %c0_11 = arith.constant 0 : index
    %c0_12 = arith.constant 0 : index
    %7 = vector.load %arg2[%c0_10, %c0_11, %c0_12] : memref<5x1x128xf32, #tpu.memory_space<vmem>>, vector<1x1x128xf32>
    %8 = vector.shape_cast %7 : vector<1x1x128xf32> to vector<1x128xf32>
    %9 = arith.truncf %4 : vector<8x128xf32> to vector<8x128xbf16>
    %cst_13 = arith.constant dense<0.000000e+00> : vector<8x128xf32>
    %10 = tpu.matmul %9, %6, %cst_13 {dimension_numbers = #tpu.dot_dimension_numbers<[1], [0], [0], [1], [0, 0, 1, 1], [], []>} : vector<8x128xbf16>, vector<128x128xbf16>, vector<8x128xf32> -> vector<8x128xf32>
    %11 = vector.broadcast %8 : vector<1x128xf32> to vector<8x128xf32>
    %12 = arith.addf %10, %11 : vector<8x128xf32>
    %cst_14 = arith.constant 0.000000e+00 : f32
    %13 = vector.broadcast %cst_14 : f32 to vector<8x128xf32>
    %14 = arith.maximumf %12, %13 : vector<8x128xf32>
    %c1 = arith.constant 1 : index
    %c0_15 = arith.constant 0 : index
    %c0_16 = arith.constant 0 : index
    %15 = vector.load %arg1[%c1, %c0_15, %c0_16] : memref<5x128x128xbf16, #tpu.memory_space<vmem>>, vector<1x128x128xbf16>
    %16 = vector.shape_cast %15 : vector<1x128x128xbf16> to vector<128x128xbf16>
    %c1_17 = arith.constant 1 : index
    %c0_18 = arith.constant 0 : index
    %c0_19 = arith.constant 0 : index
    %17 = vector.load %arg2[%c1_17, %c0_18, %c0_19] : memref<5x1x128xf32, #tpu.memory_space<vmem>>, vector<1x1x128xf32>
    %18 = vector.shape_cast %17 : vector<1x1x128xf32> to vector<1x128xf32>
    %19 = arith.truncf %14 : vector<8x128xf32> to vector<8x128xbf16>
    %cst_20 = arith.constant dense<0.000000e+00> : vector<8x128xf32>
    %20 = tpu.matmul %19, %16, %cst_20 {dimension_numbers = #tpu.dot_dimension_numbers<[1], [0], [0], [1], [0, 0, 1, 1], [], []>} : vector<8x128xbf16>, vector<128x128xbf16>, vector<8x128xf32> -> vector<8x128xf32>
    %21 = vector.broadcast %18 : vector<1x128xf32> to vector<8x128xf32>
    %22 = arith.addf %20, %21 : vector<8x128xf32>
    %cst_21 = arith.constant 0.000000e+00 : f32
    %23 = vector.broadcast %cst_21 : f32 to vector<8x128xf32>
    %24 = arith.maximumf %22, %23 : vector<8x128xf32>
    %c2 = arith.constant 2 : index
    %c0_22 = arith.constant 0 : index
    %c0_23 = arith.constant 0 : index
    %25 = vector.load %arg1[%c2, %c0_22, %c0_23] : memref<5x128x128xbf16, #tpu.memory_space<vmem>>, vector<1x128x128xbf16>
    %26 = vector.shape_cast %25 : vector<1x128x128xbf16> to vector<128x128xbf16>
    %c2_24 = arith.constant 2 : index
    %c0_25 = arith.constant 0 : index
    %c0_26 = arith.constant 0 : index
    %27 = vector.load %arg2[%c2_24, %c0_25, %c0_26] : memref<5x1x128xf32, #tpu.memory_space<vmem>>, vector<1x1x128xf32>
    %28 = vector.shape_cast %27 : vector<1x1x128xf32> to vector<1x128xf32>
    %29 = arith.truncf %24 : vector<8x128xf32> to vector<8x128xbf16>
    %cst_27 = arith.constant dense<0.000000e+00> : vector<8x128xf32>
    %30 = tpu.matmul %29, %26, %cst_27 {dimension_numbers = #tpu.dot_dimension_numbers<[1], [0], [0], [1], [0, 0, 1, 1], [], []>} : vector<8x128xbf16>, vector<128x128xbf16>, vector<8x128xf32> -> vector<8x128xf32>
    %31 = vector.broadcast %28 : vector<1x128xf32> to vector<8x128xf32>
    %32 = arith.addf %30, %31 : vector<8x128xf32>
    %cst_28 = arith.constant 0.000000e+00 : f32
    %33 = vector.broadcast %cst_28 : f32 to vector<8x128xf32>
    %34 = arith.maximumf %32, %33 : vector<8x128xf32>
    %c3 = arith.constant 3 : index
    %c0_29 = arith.constant 0 : index
    %c0_30 = arith.constant 0 : index
    %35 = vector.load %arg1[%c3, %c0_29, %c0_30] : memref<5x128x128xbf16, #tpu.memory_space<vmem>>, vector<1x128x128xbf16>
    %36 = vector.shape_cast %35 : vector<1x128x128xbf16> to vector<128x128xbf16>
    %c3_31 = arith.constant 3 : index
    %c0_32 = arith.constant 0 : index
    %c0_33 = arith.constant 0 : index
    %37 = vector.load %arg2[%c3_31, %c0_32, %c0_33] : memref<5x1x128xf32, #tpu.memory_space<vmem>>, vector<1x1x128xf32>
    %38 = vector.shape_cast %37 : vector<1x1x128xf32> to vector<1x128xf32>
    %39 = arith.truncf %34 : vector<8x128xf32> to vector<8x128xbf16>
    %cst_34 = arith.constant dense<0.000000e+00> : vector<8x128xf32>
    %40 = tpu.matmul %39, %36, %cst_34 {dimension_numbers = #tpu.dot_dimension_numbers<[1], [0], [0], [1], [0, 0, 1, 1], [], []>} : vector<8x128xbf16>, vector<128x128xbf16>, vector<8x128xf32> -> vector<8x128xf32>
    %41 = vector.broadcast %38 : vector<1x128xf32> to vector<8x128xf32>
    %42 = arith.addf %40, %41 : vector<8x128xf32>
    %cst_35 = arith.constant 0.000000e+00 : f32
    %43 = vector.broadcast %cst_35 : f32 to vector<8x128xf32>
    %44 = arith.maximumf %42, %43 : vector<8x128xf32>
    %c4 = arith.constant 4 : index
    %c0_36 = arith.constant 0 : index
    %c0_37 = arith.constant 0 : index
    %45 = vector.load %arg1[%c4, %c0_36, %c0_37] : memref<5x128x128xbf16, #tpu.memory_space<vmem>>, vector<1x128x128xbf16>
    %46 = vector.shape_cast %45 : vector<1x128x128xbf16> to vector<128x128xbf16>
    %c4_38 = arith.constant 4 : index
    %c0_39 = arith.constant 0 : index
    %c0_40 = arith.constant 0 : index
    %47 = vector.load %arg2[%c4_38, %c0_39, %c0_40] : memref<5x1x128xf32, #tpu.memory_space<vmem>>, vector<1x1x128xf32>
    %48 = vector.shape_cast %47 : vector<1x1x128xf32> to vector<1x128xf32>
    %49 = arith.truncf %44 : vector<8x128xf32> to vector<8x128xbf16>
    %cst_41 = arith.constant dense<0.000000e+00> : vector<8x128xf32>
    %50 = tpu.matmul %49, %46, %cst_41 {dimension_numbers = #tpu.dot_dimension_numbers<[1], [0], [0], [1], [0, 0, 1, 1], [], []>} : vector<8x128xbf16>, vector<128x128xbf16>, vector<8x128xf32> -> vector<8x128xf32>
    %51 = vector.broadcast %48 : vector<1x128xf32> to vector<8x128xf32>
    %52 = arith.addf %50, %51 : vector<8x128xf32>
    %cst_42 = arith.constant 0.000000e+00 : f32
    %53 = vector.broadcast %cst_42 : f32 to vector<8x128xf32>
    %54 = arith.maximumf %52, %53 : vector<8x128xf32>
    %c0_43 = arith.constant 0 : index
    %c0_44 = arith.constant 0 : index
    %55 = vector.load %arg3[%c0_43, %c0_44] : memref<8x128xf32, #tpu.memory_space<vmem>>, vector<8x128xf32>
    tpu.vector_store %arg3[%c0_43, %c0_44], %54 {strides = array<i32>} : memref<8x128xf32, #tpu.memory_space<vmem>>, vector<8x128xf32>,
    return
  }
}

</mosaic_0001>

<llo_original>
// kernel: network_forward.1
$region0: #{network_forward.1}
  #allocation0 [shape = 'u32[]', space=smem, size = 0x4, offset = 0x4, fixed_abs, tag = 'smem constant byte address 0x4 - core index']
  #allocation1 [shape = 'u32[144,128]{1,0:T(1,128)}', space=vmem, size = 0x12000, scoped, tag = 'internal scratch']
  #allocation2 [shape = 'f32[8,128]{1,0:T(8,128)}', space=vmem, size = 0x1000, scoped, tag = 'scratch operand']
  %s0 = inlined_call_operand.hbm [shape: f32[4,32], index: 0, kind: input, shape index: {}]
  %s1 = inlined_call_operand.hbm [shape: bf16[5,128,128], index: 1, kind: input, shape index: {}]
  %s2 = inlined_call_operand.vmem [shape: f32[5,1,128], index: 2, kind: input, shape index: {}]
  %s3 = inlined_call_operand.vmem [shape: f32[8,128], index: 3, kind: output, shape index: {}]
  %s4 = sld [smem:[#allocation0]]
  $region30: #{network_forward.1} parent=0
    _
  %s6 = ssub.s32 1, %s4
  %s7 = scalar_select 0, %s6, %s4
  $region1: #{network_forward.1} parent=0
    #allocation3 [shape = 'u8[2048]{0}', space=vmem, size = 0x800, scoped, tag = 'input window, operand 0, single buffered']
    #allocation4 [shape = 's32[1]{0}', space=sflag, size = 0x4, scoped, tag = 'scoped memory for network_forward.1']
    #allocation5 [shape = 'u8[163840]{0}', space=vmem, size = 0x28000, scoped, tag = 'input window, operand 1, single buffered']
    #allocation6 [shape = 's32[1]{0}', space=sflag, size = 0x4, scoped, tag = 'scoped memory for network_forward.1']
    %8 = vsyncpa [#allocation4], 0
    %9 = vsyncpa [#allocation6], 0
    // Predicated region
    $region2: #{network_forward.1} parent=1 // pred_check
      _
    $region3: #{network_forward.1} parent=1 // pred_check_branch
      %11 = sbr.rel (0) target = $region5
    $region4: #{network_forward.1} parent=1 // pred_region
      %s13 = ssub.s32 64, 64
      %14 = vsyncadd [#allocation4], %s13
      %s16 = sshll.u32 [#allocation3], 4
      %s17 = int_to_ptr.vmem [resolvable:$true] %s16
      %19 = dma.hbm_to_vmem [thread:$0]  %s0, 64, %s17, [#allocation4]
    $region5: #{network_forward.1} parent=1 // pred_fallthru
      _
    // Predicated region
    $region6: #{network_forward.1} parent=1 // pred_check
      _
    $region7: #{network_forward.1} parent=1 // pred_check_branch
      %21 = sbr.rel (0) target = $region9
    $region8: #{network_forward.1} parent=1 // pred_region
      %s23 = ssub.s32 5120, 5120
      %24 = vsyncadd [#allocation6], %s23
      %s25 = sshll.u32 [#allocation5], 4
      %s26 = int_to_ptr.vmem [resolvable:$true] %s25
      %31 = dma.hbm_to_vmem [thread:$0]  %s1, 5120, %s26, [#allocation6], 64, 64, 4
    $region9: #{network_forward.1} parent=1 // pred_fallthru
      _
    // Predicated region
    $region10: #{network_forward.1} parent=1 // pred_check
      _
    $region11: #{network_forward.1} parent=1 // pred_check_branch
      %33 = sbr.rel (0) target = $region13
    $region12: #{network_forward.1} parent=1 // pred_region
      _
    $region13: #{network_forward.1} parent=1 // pred_fallthru
      _
    // Predicated region
    $region14: #{network_forward.1} parent=1 // pred_check
      _
    $region15: #{network_forward.1} parent=1 // pred_check_branch
      %35 = sbr.rel (0) target = $region17
    $region16: #{network_forward.1} parent=1 // pred_region
      %36 = dma.done [#allocation4], 64
    $region17: #{network_forward.1} parent=1 // pred_fallthru
      _
    // Predicated region
    $region18: #{network_forward.1} parent=1 // pred_check
      _
    $region19: #{network_forward.1} parent=1 // pred_check_branch
      %38 = sbr.rel (0) target = $region21
    $region20: #{network_forward.1} parent=1 // pred_region
      %39 = dma.done [#allocation6], 5120
    $region21: #{network_forward.1} parent=1 // pred_fallthru
      _
    %41 = vst [vmem:[#allocation2] sm:$0xff] 0.0
    %v42 = vld [vmem:[#allocation3] sm:$0xf]
    %vm43 = vcmask 257024
    %44 = vst.msk [vmem:[#allocation2] sm:$0xf] %vm43, %v42
    %v45 = vld [vmem:[#allocation2] sm:$0xff]
    %v46 = vld [vmem:[#allocation5] sm:$0xf]
    %v47 = vld [vmem:[#allocation5 + $0x4] sm:$0xf]
    %v48 = vld [vmem:[#allocation5 + $0x8] sm:$0xf]
    %v49 = vld [vmem:[#allocation5 + $0xc] sm:$0xf]
    %v50 = vld [vmem:[#allocation5 + $0x10] sm:$0xf]
    %v51 = vld [vmem:[#allocation5 + $0x14] sm:$0xf]
    %v52 = vld [vmem:[#allocation5 + $0x18] sm:$0xf]
    %v53 = vld [vmem:[#allocation5 + $0x1c] sm:$0xf]
    %v54 = vld [vmem:[#allocation5 + $0x20] sm:$0xf]
    %v55 = vld [vmem:[#allocation5 + $0x24] sm:$0xf]
    %v56 = vld [vmem:[#allocation5 + $0x28] sm:$0xf]
    %v57 = vld [vmem:[#allocation5 + $0x2c] sm:$0xf]
    %v58 = vld [vmem:[#allocation5 + $0x30] sm:$0xf]
    %v59 = vld [vmem:[#allocation5 + $0x34] sm:$0xf]
    %v60 = vld [vmem:[#allocation5 + $0x38] sm:$0xf]
    %v61 = vld [vmem:[#allocation5 + $0x3c] sm:$0xf]
    %v62 = vld [vmem:[%s2] sm:$0x1]
    %v63 = vpack.c.bf16 %v45, %v45
    %v65 = vlaneseq
    %v66 = vshrl.u32 %v65, 7
    %v67 = vsub.s32 0, %v66
    %v68 = vrot.slane %v62, %v67
    %v86 = vunpack.c.l.b16 %v46
    %v87 = vunpack.c.l.b16 %v47
    %v88 = vunpack.c.l.b16 %v48
    %v89 = vunpack.c.l.b16 %v49
    %v90 = vunpack.c.l.b16 %v50
    %v91 = vunpack.c.l.b16 %v51
    %v92 = vunpack.c.l.b16 %v52
    %v93 = vunpack.c.l.b16 %v53
    %v94 = vunpack.c.l.b16 %v54
    %v95 = vunpack.c.l.b16 %v55
    %v96 = vunpack.c.l.b16 %v56
    %v97 = vunpack.c.l.b16 %v57
    %v98 = vunpack.c.l.b16 %v58
    %v99 = vunpack.c.l.b16 %v59
    %v100 = vunpack.c.l.b16 %v60
    %v101 = vunpack.c.l.b16 %v61
    %v102 = vpack.c.b16 %v87, %v86
    %v103 = vpack.c.b16 %v89, %v88
    %v104 = vpack.c.b16 %v91, %v90
    %v105 = vpack.c.b16 %v93, %v92
    %v106 = vpack.c.b16 %v95, %v94
    %v107 = vpack.c.b16 %v97, %v96
    %v108 = vpack.c.b16 %v99, %v98
    %v109 = vpack.c.b16 %v101, %v100
    %118 = vmatprep.subr.bf16.mxu0 0
    %119 = vmatpush1.bf16.msra.mxu0 %v102
    %120 = vmatprep.subr.bf16.mxu0 0
    %121 = vmatpush1.bf16.msra.mxu0 %v103
    %122 = vmatprep.subr.bf16.mxu0 0
    %123 = vmatpush1.bf16.msra.mxu0 %v104
    %124 = vmatprep.subr.bf16.mxu0 0
    %125 = vmatpush1.bf16.msra.mxu0 %v105
    %126 = vmatprep.subr.bf16.mxu0 0
    %127 = vmatpush1.bf16.msra.mxu0 %v106
    %128 = vmatprep.subr.bf16.mxu0 0
    %129 = vmatpush1.bf16.msra.mxu0 %v107
    %130 = vmatprep.subr.bf16.mxu0 0
    %131 = vmatpush1.bf16.msra.mxu0 %v108
    %132 = vmatprep.subr.bf16.mxu0 0
    %133 = vmatpush1.bf16.msra.mxu0 %v109
    %134 = vmatprep.subr.bf16.mxu0 0
    %135 = vmatpush1.bf16.msra.mxu0 0
    %136 = vmatprep.subr.bf16.mxu0 0
    %137 = vmatpush1.bf16.msra.mxu0 0
    %138 = vmatprep.subr.bf16.mxu0 0
    %139 = vmatpush1.bf16.msra.mxu0 0
    %140 = vmatprep.subr.bf16.mxu0 0
    %141 = vmatpush1.bf16.msra.mxu0 0
    %142 = vmatprep.subr.bf16.mxu0 0
    %143 = vmatpush1.bf16.msra.mxu0 0
    %144 = vmatprep.subr.bf16.mxu0 0
    %145 = vmatpush1.bf16.msra.mxu0 0
    %146 = vmatprep.subr.bf16.mxu0 0
    %147 = vmatpush1.bf16.msra.mxu0 0
    %148 = vmatprep.subr.bf16.mxu0 0
    %149 = vmatpush1.bf16.msra.mxu0 0
    %150 = vmatprep.mubr.bf16.mxu0 0
    %151 = vmatmul.mubr.bf16.gmra.mrb[0].mxu0 %v63
    %v152 = vpop.f32.mrb[0].mxu0
    %v153 = vadd.f32 %v68, %v152
    %v154 = vpop.f32.mrb[0].mxu0
    %v155 = vpop.f32.mrb[0].mxu0
    %v156 = vpop.f32.mrb[0].mxu0
    %157 = vdwg.mxu0
    %v158 = vmax.f32 %v153, 0.0
    %s159 = scalar_lea.vmem [#allocation5], 64
    %v160 = vld [vmem:[%s159] sm:$0xf]
    %v161 = vld [vmem:[%s159 + $0x4] sm:$0xf]
    %v162 = vld [vmem:[%s159 + $0x8] sm:$0xf]
    %v163 = vld [vmem:[%s159 + $0xc] sm:$0xf]
    %v164 = vld [vmem:[%s159 + $0x10] sm:$0xf]
    %v165 = vld [vmem:[%s159 + $0x14] sm:$0xf]
    %v166 = vld [vmem:[%s159 + $0x18] sm:$0xf]
    %v167 = vld [vmem:[%s159 + $0x1c] sm:$0xf]
    %v168 = vld [vmem:[%s159 + $0x20] sm:$0xf]
    %v169 = vld [vmem:[%s159 + $0x24] sm:$0xf]
    %v170 = vld [vmem:[%s159 + $0x28] sm:$0xf]
    %v171 = vld [vmem:[%s159 + $0x2c] sm:$0xf]
    %v172 = vld [vmem:[%s159 + $0x30] sm:$0xf]
    %v173 = vld [vmem:[%s159 + $0x34] sm:$0xf]
    %v174 = vld [vmem:[%s159 + $0x38] sm:$0xf]
    %v175 = vld [vmem:[%s159 + $0x3c] sm:$0xf]
    %s176 = scalar_lea.vmem %s2, 1
    %v177 = vld [vmem:[%s176] sm:$0x1]
    %v178 = vpack.c.bf16 %v158, %v158
    %v180 = vlaneseq
    %v181 = vshrl.u32 %v180, 7
    %v182 = vsub.s32 0, %v181
    %v183 = vrot.slane %v177, %v182
    %v201 = vunpack.c.l.b16 %v160
    %v202 = vunpack.c.l.b16 %v161
    %v203 = vunpack.c.l.b16 %v162
    %v204 = vunpack.c.l.b16 %v163
    %v205 = vunpack.c.l.b16 %v164
    %v206 = vunpack.c.l.b16 %v165
    %v207 = vunpack.c.l.b16 %v166
    %v208 = vunpack.c.l.b16 %v167
    %v209 = vunpack.c.l.b16 %v168
    %v210 = vunpack.c.l.b16 %v169
    %v211 = vunpack.c.l.b16 %v170
    %v212 = vunpack.c.l.b16 %v171
    %v213 = vunpack.c.l.b16 %v172
    %v214 = vunpack.c.l.b16 %v173
    %v215 = vunpack.c.l.b16 %v174
    %v216 = vunpack.c.l.b16 %v175
    %v217 = vpack.c.b16 %v202, %v201
    %v218 = vpack.c.b16 %v204, %v203
    %v219 = vpack.c.b16 %v206, %v205
    %v220 = vpack.c.b16 %v208, %v207
    %v221 = vpack.c.b16 %v210, %v209
    %v222 = vpack.c.b16 %v212, %v211
    %v223 = vpack.c.b16 %v214, %v213
    %v224 = vpack.c.b16 %v216, %v215
    %233 = vmatprep.subr.bf16.mxu0 0
    %234 = vmatpush1.bf16.msra.mxu0 %v217
    %235 = vmatprep.subr.bf16.mxu0 0
    %236 = vmatpush1.bf16.msra.mxu0 %v218
    %237 = vmatprep.subr.bf16.mxu0 0
    %238 = vmatpush1.bf16.msra.mxu0 %v219
    %239 = vmatprep.subr.bf16.mxu0 0
    %240 = vmatpush1.bf16.msra.mxu0 %v220
    %241 = vmatprep.subr.bf16.mxu0 0
    %242 = vmatpush1.bf16.msra.mxu0 %v221
    %243 = vmatprep.subr.bf16.mxu0 0
    %244 = vmatpush1.bf16.msra.mxu0 %v222
    %245 = vmatprep.subr.bf16.mxu0 0
    %246 = vmatpush1.bf16.msra.mxu0 %v223
    %247 = vmatprep.subr.bf16.mxu0 0
    %248 = vmatpush1.bf16.msra.mxu0 %v224
    %249 = vmatprep.subr.bf16.mxu0 0
    %250 = vmatpush1.bf16.msra.mxu0 0
    %251 = vmatprep.subr.bf16.mxu0 0
    %252 = vmatpush1.bf16.msra.mxu0 0
    %253 = vmatprep.subr.bf16.mxu0 0
    %254 = vmatpush1.bf16.msra.mxu0 0
    %255 = vmatprep.subr.bf16.mxu0 0
    %256 = vmatpush1.bf16.msra.mxu0 0
    %257 = vmatprep.subr.bf16.mxu0 0
    %258 = vmatpush1.bf16.msra.mxu0 0
    %259 = vmatprep.subr.bf16.mxu0 0
    %260 = vmatpush1.bf16.msra.mxu0 0
    %261 = vmatprep.subr.bf16.mxu0 0
    %262 = vmatpush1.bf16.msra.mxu0 0
    %263 = vmatprep.subr.bf16.mxu0 0
    %264 = vmatpush1.bf16.msra.mxu0 0
    %265 = vmatprep.mubr.bf16.mxu0 0
    %266 = vmatmul.mubr.bf16.gmra.mrb[0].mxu0 %v178
    %v267 = vpop.f32.mrb[0].mxu0
    %v268 = vadd.f32 %v183, %v267
    %v269 = vpop.f32.mrb[0].mxu0
    %v270 = vpop.f32.mrb[0].mxu0
    %v271 = vpop.f32.mrb[0].mxu0
    %272 = vdwg.mxu0
    %v273 = vmax.f32 %v268, 0.0
    %s274 = scalar_lea.vmem [#allocation5], 128
    %v275 = vld [vmem:[%s274] sm:$0xf]
    %v276 = vld [vmem:[%s274 + $0x4] sm:$0xf]
    %v277 = vld [vmem:[%s274 + $0x8] sm:$0xf]
    %v278 = vld [vmem:[%s274 + $0xc] sm:$0xf]
    %v279 = vld [vmem:[%s274 + $0x10] sm:$0xf]
    %v280 = vld [vmem:[%s274 + $0x14] sm:$0xf]
    %v281 = vld [vmem:[%s274 + $0x18] sm:$0xf]
    %v282 = vld [vmem:[%s274 + $0x1c] sm:$0xf]
    %v283 = vld [vmem:[%s274 + $0x20] sm:$0xf]
    %v284 = vld [vmem:[%s274 + $0x24] sm:$0xf]
    %v285 = vld [vmem:[%s274 + $0x28] sm:$0xf]
    %v286 = vld [vmem:[%s274 + $0x2c] sm:$0xf]
    %v287 = vld [vmem:[%s274 + $0x30] sm:$0xf]
    %v288 = vld [vmem:[%s274 + $0x34] sm:$0xf]
    %v289 = vld [vmem:[%s274 + $0x38] sm:$0xf]
    %v290 = vld [vmem:[%s274 + $0x3c] sm:$0xf]
    %s291 = scalar_lea.vmem %s2, 2
    %v292 = vld [vmem:[%s291] sm:$0x1]
    %v293 = vpack.c.bf16 %v273, %v273
    %v295 = vlaneseq
    %v296 = vshrl.u32 %v295, 7
    %v297 = vsub.s32 0, %v296
    %v298 = vrot.slane %v292, %v297
    %v316 = vunpack.c.l.b16 %v275
    %v317 = vunpack.c.l.b16 %v276
    %v318 = vunpack.c.l.b16 %v277
    %v319 = vunpack.c.l.b16 %v278
    %v320 = vunpack.c.l.b16 %v279
    %v321 = vunpack.c.l.b16 %v280
    %v322 = vunpack.c.l.b16 %v281
    %v323 = vunpack.c.l.b16 %v282
    %v324 = vunpack.c.l.b16 %v283
    %v325 = vunpack.c.l.b16 %v284
    %v326 = vunpack.c.l.b16 %v285
    %v327 = vunpack.c.l.b16 %v286
    %v328 = vunpack.c.l.b16 %v287
    %v329 = vunpack.c.l.b16 %v288
    %v330 = vunpack.c.l.b16 %v289
    %v331 = vunpack.c.l.b16 %v290
    %v332 = vpack.c.b16 %v317, %v316
    %v333 = vpack.c.b16 %v319, %v318
    %v334 = vpack.c.b16 %v321, %v320
    %v335 = vpack.c.b16 %v323, %v322
    %v336 = vpack.c.b16 %v325, %v324
    %v337 = vpack.c.b16 %v327, %v326
    %v338 = vpack.c.b16 %v329, %v328
    %v339 = vpack.c.b16 %v331, %v330
    %348 = vmatprep.subr.bf16.mxu0 0
    %349 = vmatpush1.bf16.msra.mxu0 %v332
    %350 = vmatprep.subr.bf16.mxu0 0
    %351 = vmatpush1.bf16.msra.mxu0 %v333
    %352 = vmatprep.subr.bf16.mxu0 0
    %353 = vmatpush1.bf16.msra.mxu0 %v334
    %354 = vmatprep.subr.bf16.mxu0 0
    %355 = vmatpush1.bf16.msra.mxu0 %v335
    %356 = vmatprep.subr.bf16.mxu0 0
    %357 = vmatpush1.bf16.msra.mxu0 %v336
    %358 = vmatprep.subr.bf16.mxu0 0
    %359 = vmatpush1.bf16.msra.mxu0 %v337
    %360 = vmatprep.subr.bf16.mxu0 0
    %361 = vmatpush1.bf16.msra.mxu0 %v338
    %362 = vmatprep.subr.bf16.mxu0 0
    %363 = vmatpush1.bf16.msra.mxu0 %v339
    %364 = vmatprep.subr.bf16.mxu0 0
    %365 = vmatpush1.bf16.msra.mxu0 0
    %366 = vmatprep.subr.bf16.mxu0 0
    %367 = vmatpush1.bf16.msra.mxu0 0
    %368 = vmatprep.subr.bf16.mxu0 0
    %369 = vmatpush1.bf16.msra.mxu0 0
    %370 = vmatprep.subr.bf16.mxu0 0
    %371 = vmatpush1.bf16.msra.mxu0 0
    %372 = vmatprep.subr.bf16.mxu0 0
    %373 = vmatpush1.bf16.msra.mxu0 0
    %374 = vmatprep.subr.bf16.mxu0 0
    %375 = vmatpush1.bf16.msra.mxu0 0
    %376 = vmatprep.subr.bf16.mxu0 0
    %377 = vmatpush1.bf16.msra.mxu0 0
    %378 = vmatprep.subr.bf16.mxu0 0
    %379 = vmatpush1.bf16.msra.mxu0 0
    %380 = vmatprep.mubr.bf16.mxu0 0
    %381 = vmatmul.mubr.bf16.gmra.mrb[0].mxu0 %v293
    %v382 = vpop.f32.mrb[0].mxu0
    %v383 = vadd.f32 %v298, %v382
    %v384 = vpop.f32.mrb[0].mxu0
    %v385 = vpop.f32.mrb[0].mxu0
    %v386 = vpop.f32.mrb[0].mxu0
    %387 = vdwg.mxu0
    %v388 = vmax.f32 %v383, 0.0
    %s389 = scalar_lea.vmem [#allocation5], 192
    %v390 = vld [vmem:[%s389] sm:$0xf]
    %v391 = vld [vmem:[%s389 + $0x4] sm:$0xf]
    %v392 = vld [vmem:[%s389 + $0x8] sm:$0xf]
    %v393 = vld [vmem:[%s389 + $0xc] sm:$0xf]
    %v394 = vld [vmem:[%s389 + $0x10] sm:$0xf]
    %v395 = vld [vmem:[%s389 + $0x14] sm:$0xf]
    %v396 = vld [vmem:[%s389 + $0x18] sm:$0xf]
    %v397 = vld [vmem:[%s389 + $0x1c] sm:$0xf]
    %v398 = vld [vmem:[%s389 + $0x20] sm:$0xf]
    %v399 = vld [vmem:[%s389 + $0x24] sm:$0xf]
    %v400 = vld [vmem:[%s389 + $0x28] sm:$0xf]
    %v401 = vld [vmem:[%s389 + $0x2c] sm:$0xf]
    %v402 = vld [vmem:[%s389 + $0x30] sm:$0xf]
    %v403 = vld [vmem:[%s389 + $0x34] sm:$0xf]
    %v404 = vld [vmem:[%s389 + $0x38] sm:$0xf]
    %v405 = vld [vmem:[%s389 + $0x3c] sm:$0xf]
    %s406 = scalar_lea.vmem %s2, 3
    %v407 = vld [vmem:[%s406] sm:$0x1]
    %v408 = vpack.c.bf16 %v388, %v388
    %v410 = vlaneseq
    %v411 = vshrl.u32 %v410, 7
    %v412 = vsub.s32 0, %v411
    %v413 = vrot.slane %v407, %v412
    %v431 = vunpack.c.l.b16 %v390
    %v432 = vunpack.c.l.b16 %v391
    %v433 = vunpack.c.l.b16 %v392
    %v434 = vunpack.c.l.b16 %v393
    %v435 = vunpack.c.l.b16 %v394
    %v436 = vunpack.c.l.b16 %v395
    %v437 = vunpack.c.l.b16 %v396
    %v438 = vunpack.c.l.b16 %v397
    %v439 = vunpack.c.l.b16 %v398
    %v440 = vunpack.c.l.b16 %v399
    %v441 = vunpack.c.l.b16 %v400
    %v442 = vunpack.c.l.b16 %v401
    %v443 = vunpack.c.l.b16 %v402
    %v444 = vunpack.c.l.b16 %v403
    %v445 = vunpack.c.l.b16 %v404
    %v446 = vunpack.c.l.b16 %v405
    %v447 = vpack.c.b16 %v432, %v431
    %v448 = vpack.c.b16 %v434, %v433
    %v449 = vpack.c.b16 %v436, %v435
    %v450 = vpack.c.b16 %v438, %v437
    %v451 = vpack.c.b16 %v440, %v439
    %v452 = vpack.c.b16 %v442, %v441
    %v453 = vpack.c.b16 %v444, %v443
    %v454 = vpack.c.b16 %v446, %v445
    %463 = vmatprep.subr.bf16.mxu0 0
    %464 = vmatpush1.bf16.msra.mxu0 %v447
    %465 = vmatprep.subr.bf16.mxu0 0
    %466 = vmatpush1.bf16.msra.mxu0 %v448
    %467 = vmatprep.subr.bf16.mxu0 0
    %468 = vmatpush1.bf16.msra.mxu0 %v449
    %469 = vmatprep.subr.bf16.mxu0 0
    %470 = vmatpush1.bf16.msra.mxu0 %v450
    %471 = vmatprep.subr.bf16.mxu0 0
    %472 = vmatpush1.bf16.msra.mxu0 %v451
    %473 = vmatprep.subr.bf16.mxu0 0
    %474 = vmatpush1.bf16.msra.mxu0 %v452
    %475 = vmatprep.subr.bf16.mxu0 0
    %476 = vmatpush1.bf16.msra.mxu0 %v453
    %477 = vmatprep.subr.bf16.mxu0 0
    %478 = vmatpush1.bf16.msra.mxu0 %v454
    %479 = vmatprep.subr.bf16.mxu0 0
    %480 = vmatpush1.bf16.msra.mxu0 0
    %481 = vmatprep.subr.bf16.mxu0 0
    %482 = vmatpush1.bf16.msra.mxu0 0
    %483 = vmatprep.subr.bf16.mxu0 0
    %484 = vmatpush1.bf16.msra.mxu0 0
    %485 = vmatprep.subr.bf16.mxu0 0
    %486 = vmatpush1.bf16.msra.mxu0 0
    %487 = vmatprep.subr.bf16.mxu0 0
    %488 = vmatpush1.bf16.msra.mxu0 0
    %489 = vmatprep.subr.bf16.mxu0 0
    %490 = vmatpush1.bf16.msra.mxu0 0
    %491 = vmatprep.subr.bf16.mxu0 0
    %492 = vmatpush1.bf16.msra.mxu0 0
    %493 = vmatprep.subr.bf16.mxu0 0
    %494 = vmatpush1.bf16.msra.mxu0 0
    %495 = vmatprep.mubr.bf16.mxu0 0
    %496 = vmatmul.mubr.bf16.gmra.mrb[0].mxu0 %v408
    %v497 = vpop.f32.mrb[0].mxu0
    %v498 = vadd.f32 %v413, %v497
    %v499 = vpop.f32.mrb[0].mxu0
    %v500 = vpop.f32.mrb[0].mxu0
    %v501 = vpop.f32.mrb[0].mxu0
    %502 = vdwg.mxu0
    %v503 = vmax.f32 %v498, 0.0
    %s504 = scalar_lea.vmem [#allocation5], 256
    %v505 = vld [vmem:[%s504] sm:$0xf]
    %v506 = vld [vmem:[%s504 + $0x4] sm:$0xf]
    %v507 = vld [vmem:[%s504 + $0x8] sm:$0xf]
    %v508 = vld [vmem:[%s504 + $0xc] sm:$0xf]
    %v509 = vld [vmem:[%s504 + $0x10] sm:$0xf]
    %v510 = vld [vmem:[%s504 + $0x14] sm:$0xf]
    %v511 = vld [vmem:[%s504 + $0x18] sm:$0xf]
    %v512 = vld [vmem:[%s504 + $0x1c] sm:$0xf]
    %v513 = vld [vmem:[%s504 + $0x20] sm:$0xf]
    %v514 = vld [vmem:[%s504 + $0x24] sm:$0xf]
    %v515 = vld [vmem:[%s504 + $0x28] sm:$0xf]
    %v516 = vld [vmem:[%s504 + $0x2c] sm:$0xf]
    %v517 = vld [vmem:[%s504 + $0x30] sm:$0xf]
    %v518 = vld [vmem:[%s504 + $0x34] sm:$0xf]
    %v519 = vld [vmem:[%s504 + $0x38] sm:$0xf]
    %v520 = vld [vmem:[%s504 + $0x3c] sm:$0xf]
    %s521 = scalar_lea.vmem %s2, 4
    %v522 = vld [vmem:[%s521] sm:$0x1]
    %v523 = vpack.c.bf16 %v503, %v503
    %v525 = vlaneseq
    %v526 = vshrl.u32 %v525, 7
    %v527 = vsub.s32 0, %v526
    %v528 = vrot.slane %v522, %v527
    %v546 = vunpack.c.l.b16 %v505
    %v547 = vunpack.c.l.b16 %v506
    %v548 = vunpack.c.l.b16 %v507
    %v549 = vunpack.c.l.b16 %v508
    %v550 = vunpack.c.l.b16 %v509
    %v551 = vunpack.c.l.b16 %v510
    %v552 = vunpack.c.l.b16 %v511
    %v553 = vunpack.c.l.b16 %v512
    %v554 = vunpack.c.l.b16 %v513
    %v555 = vunpack.c.l.b16 %v514
    %v556 = vunpack.c.l.b16 %v515
    %v557 = vunpack.c.l.b16 %v516
    %v558 = vunpack.c.l.b16 %v517
    %v559 = vunpack.c.l.b16 %v518
    %v560 = vunpack.c.l.b16 %v519
    %v561 = vunpack.c.l.b16 %v520
    %v562 = vpack.c.b16 %v547, %v546
    %v563 = vpack.c.b16 %v549, %v548
    %v564 = vpack.c.b16 %v551, %v550
    %v565 = vpack.c.b16 %v553, %v552
    %v566 = vpack.c.b16 %v555, %v554
    %v567 = vpack.c.b16 %v557, %v556
    %v568 = vpack.c.b16 %v559, %v558
    %v569 = vpack.c.b16 %v561, %v560
    %578 = vmatprep.subr.bf16.mxu0 0
    %579 = vmatpush1.bf16.msra.mxu0 %v562
    %580 = vmatprep.subr.bf16.mxu0 0
    %581 = vmatpush1.bf16.msra.mxu0 %v563
    %582 = vmatprep.subr.bf16.mxu0 0
    %583 = vmatpush1.bf16.msra.mxu0 %v564
    %584 = vmatprep.subr.bf16.mxu0 0
    %585 = vmatpush1.bf16.msra.mxu0 %v565
    %586 = vmatprep.subr.bf16.mxu0 0
    %587 = vmatpush1.bf16.msra.mxu0 %v566
    %588 = vmatprep.subr.bf16.mxu0 0
    %589 = vmatpush1.bf16.msra.mxu0 %v567
    %590 = vmatprep.subr.bf16.mxu0 0
    %591 = vmatpush1.bf16.msra.mxu0 %v568
    %592 = vmatprep.subr.bf16.mxu0 0
    %593 = vmatpush1.bf16.msra.mxu0 %v569
    %594 = vmatprep.subr.bf16.mxu0 0
    %595 = vmatpush1.bf16.msra.mxu0 0
    %596 = vmatprep.subr.bf16.mxu0 0
    %597 = vmatpush1.bf16.msra.mxu0 0
    %598 = vmatprep.subr.bf16.mxu0 0
    %599 = vmatpush1.bf16.msra.mxu0 0
    %600 = vmatprep.subr.bf16.mxu0 0
    %601 = vmatpush1.bf16.msra.mxu0 0
    %602 = vmatprep.subr.bf16.mxu0 0
    %603 = vmatpush1.bf16.msra.mxu0 0
    %604 = vmatprep.subr.bf16.mxu0 0
    %605 = vmatpush1.bf16.msra.mxu0 0
    %606 = vmatprep.subr.bf16.mxu0 0
    %607 = vmatpush1.bf16.msra.mxu0 0
    %608 = vmatprep.subr.bf16.mxu0 0
    %609 = vmatpush1.bf16.msra.mxu0 0
    %610 = vmatprep.mubr.bf16.mxu0 0
    %611 = vmatmul.mubr.bf16.gmra.mrb[0].mxu0 %v523
    %v612 = vpop.f32.mrb[0].mxu0
    %v613 = vadd.f32 %v528, %v612
    %v614 = vpop.f32.mrb[0].mxu0
    %v615 = vpop.f32.mrb[0].mxu0
    %v616 = vpop.f32.mrb[0].mxu0
    %617 = vdwg.mxu0
    %v618 = vmax.f32 %v613, 0.0
    %619 = vst [vmem:[%s3] sm:$0xff] %v618
    // Predicated region
    $region22: #{network_forward.1} parent=1 // pred_check
      _
    $region23: #{network_forward.1} parent=1 // pred_check_branch
      %621 = sbr.rel (0) target = $region25
    $region24: #{network_forward.1} parent=1 // pred_region
      _
    $region25: #{network_forward.1} parent=1 // pred_fallthru
      _
    // Predicated region
    $region26: #{network_forward.1} parent=1 // pred_check
      _
    $region27: #{network_forward.1} parent=1 // pred_check_branch
      %623 = sbr.rel (0) target = $region29
    $region28: #{network_forward.1} parent=1 // pred_region
      _
    $region29: #{network_forward.1} parent=1 // pred_fallthru
      _
    %624 = vsyncpa [#allocation4], 1
    %625 = vsyncpa [#allocation6], 1

</llo_original>
